<compile_context>
chip_gen: v5e
topology: v5e:2x2
jax: 0.10.0
libtpu: 0.0.40
codegen_flags: <defaults>
</compile_context>

<pallas_src>
import jax
import jax.numpy as jnp
from jax.experimental import pallas as pl
from jax.experimental.pallas import tpu as pltpu

_LANE = 128
_MIB = 1024 * 1024


def _h_swish_kernel(x_ref, o_ref):
    x = x_ref[...]
    # relu6(x + 3) * (1/6) — math stays in the input dtype (no f32 upcast for
    # bf16, so bf16 tensors move half the HBM bytes end to end).
    hs = jnp.clip(x + 3.0, 0.0, 6.0) * (1.0 / 6.0)
    o_ref[...] = (x * hs).astype(o_ref.dtype)


def _h_swish_ref(x):
    """Pure-JAX reference (also the fallback for huge ragged tensors)."""
    return x * (jnp.clip(x + 3.0, 0.0, 6.0) / 6.0)


def _round_up(a: int, b: int) -> int:
    return -(-a // b) * b


def _sublane(dtype) -> int:
    # Minimum sublane packing per dtype width (f32: 8, bf16: 16, int8/fp8: 32).
    return {4: 8, 2: 16, 1: 32}.get(jnp.dtype(dtype).itemsize, 8)


def _tpu_params():
    """Returns (vmem_capacity_bytes, multi_tensorcore) with safe fallbacks."""
    try:
        vmem_cap = int(pltpu.get_tpu_info().vmem_capacity_bytes)
        # v7x-class parts have 64 MiB per-TC VMEM and 2 TensorCores per chip;
        # v5e/v6e report 128 MiB and have a single TensorCore.
        multi_tc = vmem_cap <= 64 * _MIB
    except Exception:
        vmem_cap = 64 * _MIB   # conservative cap for the VMEM limit below
        multi_tc = False       # don't force grid splits if we can't detect
    return vmem_cap, multi_tc


def _pick_width(n_elem: int, max_width: int = 8192):
    """Widest lane-dense width (multiple of 128, <= max_width) dividing n_elem.

    Returns None if n_elem is not a multiple of 128 (ragged path)."""
    for d in range(max_width // _LANE, 0, -1):
        w = d * _LANE
        if n_elem % w == 0:
            return w
    return None


def _tile_rows_for(rows: int, width: int, itemsize: int, sub: int,
                   block_bytes: int, min_steps: int) -> int:
    """Rows per block: as large as the block budget allows.

    If the whole tensor fits one block, use a single full-array block (always
    layout-legal, zero extra grid steps).  On multi-TC chips, shrink so there
    are >= min_steps grid steps (>= 2 per core => DMA overlap per core)."""
    rows_per_block = max(sub, (block_bytes // (width * itemsize)) // sub * sub)
    tile = rows if rows_per_block >= rows else rows_per_block
    if min_steps > 1 and rows > sub:
        cap = max(sub, _round_up(pl.cdiv(rows, min_steps), sub))
        tile = min(tile, cap)
    return max(1, tile)


def _h_swish_2d(x2d: jax.Array, tile_rows: int, vmem_limit_bytes: int) -> jax.Array:
    rows, width = x2d.shape
    grid = (pl.cdiv(rows, tile_rows),)
    return pl.pallas_call(
        _h_swish_kernel,
        out_shape=jax.ShapeDtypeStruct((rows, width), x2d.dtype),
        grid_spec=pltpu.PrefetchScalarGridSpec(
            num_scalar_prefetch=0,
            grid=grid,
            in_specs=[pl.BlockSpec((tile_rows, width), lambda i: (i, 0))],
            out_specs=pl.BlockSpec((tile_rows, width), lambda i: (i, 0)),
        ),
        compiler_params=pltpu.CompilerParams(
            dimension_semantics=("parallel",),
            vmem_limit_bytes=int(vmem_limit_bytes),
        ),
    )(x2d)


def h_swish(x: jax.Array, *, block_bytes: int | None = None) -> jax.Array:
    """Elementwise hard-swish on an NCHW (or any-shape) tensor."""
    orig_shape = x.shape
    n_elem = x.size
    if n_elem == 0:
        return x

    itemsize = jnp.dtype(x.dtype).itemsize
    sub = _sublane(x.dtype)
    vmem_cap, multi_tc = _tpu_params()

    if block_bytes is None:
        # ~8 MiB per array per block: with double-buffered in+out that is
        # ~32 MiB of VMEM — safe on v7x's 64 MiB/TC and on v5e/v6e once the
        # scoped limit is raised explicitly below.
        block_bytes = 8 * _MIB
    # Double-buffered in+out ≈ 4x block, plus margin; never above 3/4 of VMEM.
    vmem_limit = int(min(vmem_cap * 3 // 4, 4 * block_bytes + 8 * _MIB))
    min_steps = 4 if multi_tc else 1

    width = _pick_width(n_elem)
    if width is not None:
        # Fast path: pure (no-copy) reshape around the kernel; no pad, no slice.
        rows = n_elem // width
        x2d = jnp.reshape(x, (rows, width))
        tile_rows = _tile_rows_for(rows, width, itemsize, sub,
                                   block_bytes, min_steps)
        out2d = _h_swish_2d(x2d, tile_rows, vmem_limit)
        return jnp.reshape(out2d, orig_shape)

    # Ragged path: n_elem is not a multiple of 128 (e.g. 1x3x56x56 = 9408).
    # Avoid pad + slice (each a full HBM read+write): run the tensor as ONE
    # full-array block — block_shape equal to the full array dims is always
    # layout-legal even with a ragged last dim; the lane tail is hardware
    # masked on store.
    if n_elem * itemsize <= block_bytes:
        if x.ndim >= 2:
            rows, width = n_elem // x.shape[-1], x.shape[-1]
        else:
            rows, width = 1, n_elem
        x2d = jnp.reshape(x, (rows, width))
        out2d = _h_swish_2d(x2d, rows, vmem_limit)
        return jnp.reshape(out2d, orig_shape)

    # TODO(synk): in-kernel lane-masked tail store to keep huge ragged tensors
    # on the Pallas path; the fused XLA elementwise op below is already at the
    # HBM roofline, so this fallback costs a single read+write pass.
    return _h_swish_ref(x)


if __name__ == "__main__":
    key = jax.random.PRNGKey(0)
    k1, k2, k3, k4 = jax.random.split(key, 4)

    # Small NCHW input consistent with the module (it accepts any NCHW tensor).
    x = jax.random.normal(k1, (2, 4, 16, 16), dtype=jnp.float32)
    out = jax.block_until_ready(h_swish(x))
    assert out.shape == x.shape and out.dtype == x.dtype
    assert jnp.allclose(out, _h_swish_ref(x), atol=1e-6, rtol=1e-6)

    # Ragged element count (9408, not a multiple of 128): single full-array
    # block Pallas path — no pad, no slice.
    x2 = jax.random.normal(k2, (1, 3, 56, 56), dtype=jnp.float32)
    out2 = jax.block_until_ready(h_swish(x2))
    assert out2.shape == x2.shape and out2.dtype == x2.dtype
    assert jnp.allclose(out2, _h_swish_ref(x2), atol=1e-6, rtol=1e-6)

    # bf16 input: math stays in bf16 (half the HBM traffic), sublane packing 16.
    x3 = jax.random.normal(k3, (2, 4, 16, 16), dtype=jnp.bfloat16)
    out3 = jax.block_until_ready(h_swish(x3))
    assert out3.shape == x3.shape and out3.dtype == x3.dtype
    assert jnp.allclose(out3.astype(jnp.float32),
                        _h_swish_ref(x3).astype(jnp.float32),
                        atol=2e-2, rtol=2e-2)

    # Force the multi-block path (grid > 1 with a partial last block) by
    # shrinking the block budget; exercises the tiled/pipelined code path.
    x4 = jax.random.normal(k4, (36, 64, 128), dtype=jnp.float32)
    out4 = jax.block_until_ready(h_swish(x4, block_bytes=256 * 1024))
    assert out4.shape == x4.shape and out4.dtype == x4.dtype
    assert jnp.allclose(out4, _h_swish_ref(x4), atol=1e-6, rtol=1e-6)

    print("KERNEL_OK")
</pallas_src>

<mosaic_0001>
module attributes {stable_mosaic.version = 11 : i64} {
  func.func @_h_swish_kernel(%arg0: i32, %arg1: memref<1x2048xf32, #tpu.memory_space<vmem>>, %arg2: memref<1x2048xf32, #tpu.memory_space<vmem>>) attributes {dimension_semantics = [#tpu.dimension_semantics<parallel>], iteration_bounds = array<i64: 1>, scalar_prefetch = 0 : i64, scratch_operands = 0 : i64, tpu.core_type = #tpu.core_type<tc>, window_params = [{transform_indices = @transform_0, window_bounds = array<i64: 1, 2048>}, {transform_indices = @transform_1, window_bounds = array<i64: 1, 2048>}]} {
    %c0 = arith.constant 0 : index
    %c0_0 = arith.constant 0 : index
    %0 = vector.load %arg1[%c0, %c0_0] : memref<1x2048xf32, #tpu.memory_space<vmem>>, vector<1x2048xf32>
    %cst = arith.constant 3.000000e+00 : f32
    %1 = vector.broadcast %cst : f32 to vector<1x2048xf32>
    %2 = arith.addf %0, %1 : vector<1x2048xf32>
    %cst_1 = arith.constant 0.000000e+00 : f32
    %cst_2 = arith.constant 6.000000e+00 : f32
    %3 = vector.broadcast %cst_1 : f32 to vector<1x2048xf32>
    %4 = arith.maximumf %3, %2 : vector<1x2048xf32>
    %5 = vector.broadcast %cst_2 : f32 to vector<1x2048xf32>
    %6 = arith.minimumf %5, %4 : vector<1x2048xf32>
    %cst_3 = arith.constant 0.166666672 : f32
    %7 = vector.broadcast %cst_3 : f32 to vector<1x2048xf32>
    %8 = arith.mulf %6, %7 : vector<1x2048xf32>
    %9 = arith.mulf %0, %8 : vector<1x2048xf32>
    %c0_4 = arith.constant 0 : index
    %c0_5 = arith.constant 0 : index
    %10 = vector.load %arg2[%c0_4, %c0_5] : memref<1x2048xf32, #tpu.memory_space<vmem>>, vector<1x2048xf32>
    tpu.vector_store %arg2[%c0_4, %c0_5], %9 {strides = array<i32>} : memref<1x2048xf32, #tpu.memory_space<vmem>>, vector<1x2048xf32>,
    return
  }
  func.func @transform_0(%arg0: i32) -> (i32, i32) {
    %c0_i32 = arith.constant 0 : i32
    %c0_i32_0 = arith.constant 0 : i32
    return %arg0, %c0_i32 : i32, i32
  }
  func.func @transform_1(%arg0: i32) -> (i32, i32) {
    %c0_i32 = arith.constant 0 : i32
    %c0_i32_0 = arith.constant 0 : i32
    return %arg0, %c0_i32 : i32, i32
  }
}

</mosaic_0001>

<llo_original>
// kernel: tpu_custom_call.1
$region0: #{tpu_custom_call.1}
  #allocation0 [shape = 'u32[]', space=smem, size = 0x4, offset = 0x4, fixed_abs, tag = 'smem constant byte address 0x4 - core index']
  #allocation1 [shape = 'u32[72,128]{1,0:T(1,128)}', space=vmem, size = 0x9000, scoped, tag = 'internal scratch']
  %s0 = inlined_call_operand.hbm [shape: f32[1,2048], index: 0, kind: input, shape index: {}]
  %s1 = inlined_call_operand.hbm [shape: f32[1,2048], index: 1, kind: output, shape index: {}]
  %s2 = sld [smem:[#allocation0]]
  $region18: #{tpu_custom_call.1} parent=0
    _
  %s4 = ssub.s32 1, %s2
  %s5 = scalar_select 0, %s4, %s2
  $region1: #{tpu_custom_call.1} parent=0
    #allocation2 [shape = 'u8[8192]{0}', space=vmem, size = 0x2000, scoped, tag = 'input window, operand 0, single buffered']
    #allocation3 [shape = 's32[1]{0}', space=sflag, size = 0x4, scoped, tag = 'scoped memory for tpu_custom_call.1']
    #allocation4 [shape = 's32[1]{0}', space=sflag, size = 0x4, scoped, tag = 'scoped memory for tpu_custom_call.1']
    #allocation5 [shape = 'u8[8192]{0}', space=vmem, size = 0x2000, scoped, tag = 'output window, operand 0, single buffered']
    %6 = vsyncpa [#allocation3], 0
    %7 = vsyncpa [#allocation4], 0
    // Predicated region
    $region2: #{tpu_custom_call.1} parent=1 // pred_check
      _
    $region3: #{tpu_custom_call.1} parent=1 // pred_check_branch
      %9 = sbr.rel (0) target = $region5
    $region4: #{tpu_custom_call.1} parent=1 // pred_region
      %11 = vsyncadd [#allocation3], 0
      %s13 = sshll.u32 %s0, 4
      %s14 = int_to_ptr.hbm [resolvable:$true] %s13
      %s15 = sshll.u32 [#allocation2], 4
      %s16 = int_to_ptr.vmem [resolvable:$true] %s15
      %18 = dma.hbm_to_vmem [thread:$0]  %s14, 256, %s16, [#allocation3]
    $region5: #{tpu_custom_call.1} parent=1 // pred_fallthru
      _
    // Predicated region
    $region6: #{tpu_custom_call.1} parent=1 // pred_check
      _
    $region7: #{tpu_custom_call.1} parent=1 // pred_check_branch
      %20 = sbr.rel (0) target = $region9
    $region8: #{tpu_custom_call.1} parent=1 // pred_region
      %22 = dma.done [#allocation3], 256
    $region9: #{tpu_custom_call.1} parent=1 // pred_fallthru
      _
    %v23 = vld [vmem:[#allocation2] sm:$0xff]
    %v24 = vld [vmem:[#allocation2 + $0x8] sm:$0xff]
    %v25 = vadd.f32 %v23, 3.0
    %v26 = vadd.f32 %v24, 3.0
    %v27 = vmax.f32 %v25, 0.0
    %v28 = vmax.f32 %v26, 0.0
    %v29 = vmin.f32 %v27, 6.0
    %v30 = vmin.f32 %v28, 6.0
    %v31 = vmul.f32 %v29, 0.16666667
    %v32 = vmul.f32 %v30, 0.16666667
    %v33 = vmul.f32 %v23, %v31
    %v34 = vmul.f32 %v24, %v32
    %35 = vst [vmem:[#allocation5] sm:$0xff] %v33
    %36 = vst [vmem:[#allocation5 + $0x8] sm:$0xff] %v34
    // Predicated region
    $region10: #{tpu_custom_call.1} parent=1 // pred_check
      _
    $region11: #{tpu_custom_call.1} parent=1 // pred_check_branch
      %38 = sbr.rel (0) target = $region13
    $region12: #{tpu_custom_call.1} parent=1 // pred_region
      %40 = vsyncadd [#allocation4], 0
      %s42 = sshll.u32 [#allocation5], 4
      %s43 = int_to_ptr.vmem [resolvable:$true] %s42
      %s44 = sshll.u32 %s1, 4
      %s45 = int_to_ptr.hbm [resolvable:$true] %s44
      %47 = dma.vmem_to_hbm [thread:$0]  %s43, 256, %s45, [#allocation4]
    $region13: #{tpu_custom_call.1} parent=1 // pred_fallthru
      _
    // Predicated region
    $region14: #{tpu_custom_call.1} parent=1 // pred_check
      _
    $region15: #{tpu_custom_call.1} parent=1 // pred_check_branch
      %49 = sbr.rel (0) target = $region17
    $region16: #{tpu_custom_call.1} parent=1 // pred_region
      %51 = dma.done [#allocation4], 256
    $region17: #{tpu_custom_call.1} parent=1 // pred_fallthru
      _
    %52 = vsyncpa [#allocation3], 1
    %53 = vsyncpa [#allocation4], 1

</llo_original>
